<compile_context>
chip_gen: v6e
topology: v6e:2x2x1
jax: 0.10.0
libtpu: 0.0.40
codegen_flags: <defaults>
</compile_context>

<pallas_src>
import jax
import jax.numpy as jnp
from jax.experimental import pallas as pl
from jax.experimental.pallas import tpu as pltpu


def _make_kernel(epsilon, num_classes, tc, num_c_tiles, mask_classes):
    eps = float(epsilon)
    uni = eps / float(num_classes)          # weight of every class
    w_tgt = (1.0 - eps) + uni               # weight of the target class
    neg_inf = float("-inf")

    def kernel(logits_ref, targets_ref, loss_ref, m_sc, l_sc, acc_sc):
        k = pl.program_id(1)

        @pl.when(k == 0)
        def _init():
            m_sc[...] = jnp.full(m_sc.shape, neg_inf, dtype=jnp.float32)
            l_sc[...] = jnp.zeros(l_sc.shape, dtype=jnp.float32)
            acc_sc[...] = jnp.zeros(acc_sc.shape, dtype=jnp.float32)

        x_in = logits_ref[...]                              # (TB, TC) native dtype
        tgt = targets_ref[...]                              # (TB, 1) int32

        # (1, TC) lane row-vector of absolute class indices for this tile;
        # O(TC) VALU work instead of O(TB*TC) full-tile iota.
        col_row = k * tc + jax.lax.broadcasted_iota(jnp.int32, (1, tc), 1)

        def update(masked):
            if masked:
                valid_row = col_row < num_classes           # (1, TC)
                # Lane *select* (not multiply): garbage tail lanes never leak.
                x_for_max = jnp.where(
                    valid_row, x_in, jnp.asarray(neg_inf, dtype=x_in.dtype))
            else:
                valid_row = None
                x_for_max = x_in

            # --- online (streaming) logsumexp over class tiles ---
            blk_max = jnp.max(x_for_max, axis=1, keepdims=True).astype(jnp.float32)
            m_old = m_sc[...]
            m_new = jnp.maximum(m_old, blk_max)
            alpha = jnp.exp(m_old - m_new)                  # rescale old sum

            x = x_in.astype(jnp.float32)
            e = jnp.exp(x - m_new)                          # EUP

            # Fused weighted accumulator: keep*x[t] + uni*sum(x) == sum_c w_c x_c.
            is_tgt = col_row == tgt                         # (TB, TC) via broadcast
            wx = jnp.where(is_tgt, w_tgt, uni) * x

            if masked:
                e = jnp.where(valid_row, e, 0.0)            # selects, not multiplies
                wx = jnp.where(valid_row, wx, 0.0)

            l_sc[...] = l_sc[...] * alpha + jnp.sum(e, axis=1, keepdims=True)
            acc_sc[...] = acc_sc[...] + jnp.sum(wx, axis=1, keepdims=True)
            m_sc[...] = m_new

        if mask_classes:
            # Only the last class tile pays the tail mask; interior tiles run
            # the lean path (pl.when cold paths are skipped at runtime).
            @pl.when(k < num_c_tiles - 1)
            def _fast():
                update(masked=False)

            @pl.when(k == num_c_tiles - 1)
            def _tail():
                update(masked=True)
        else:
            update(masked=False)

        @pl.when(k == num_c_tiles - 1)
        def _finalize():
            lse = m_sc[...] + jnp.log(l_sc[...])            # per-row logsumexp
            loss_ref[...] = (lse - acc_sc[...]).astype(loss_ref.dtype)

    return kernel


def cross_entropy_label_smooth(logits, targets, *, epsilon=0.1, reduction=True,
                               tb=None, tc=None, logits_buffers=2):
    """logits: (B, C) float (f32 or bf16), targets: (B,) int labels in [0, C).

    Returns scalar mean loss if `reduction`, else per-sample loss (B,).
    `tb` / `tc` are batch / class tile sizes (auto-picked from a VMEM byte
    budget if None). `logits_buffers` lets you sweep pl.Buffered(3) on the
    logits stream (default 2; keep 2 if VMEM-tight on v7x).
    """
    B, C = logits.shape
    targets_2d = targets.astype(jnp.int32).reshape(B, 1)
    dtype_bytes = jnp.dtype(logits.dtype).itemsize

    # Per-tile logits byte budget. x2 double-buffering => ~16 MiB of logits in
    # flight, safely under the 48 MiB vmem cap below on v7x (64 MiB VMEM) and
    # with plenty of headroom on v5e/v6e (128 MiB).
    TILE_BYTES = 8 * 1024 * 1024

    # ---- class tile: full C when it fits, else a large multiple of 128 ----
    if tc is None:
        tc = C if C <= 8192 else 8192
    tc = int(tc)
    if tc >= C:
        tc = C
    else:
        tc = max(128, (tc // 128) * 128)
        if tc >= C:
            tc = C

    # ---- batch tile: fill the byte budget, multiple of 8, cap 512 ----
    if tb is None:
        tb = max(8, TILE_BYTES // max(1, tc * dtype_bytes))
        tb = min(tb, 512, B)
        if B >= 16:
            # keep num_b >= 2 so both v7x TensorCores get work
            tb = min(tb, max(8, ((B // 2) // 8) * 8))
    else:
        tb = min(int(tb), B)
    if tb < B:
        tb = max(8, (tb // 8) * 8)

    num_b = pl.cdiv(B, tb)
    num_c = pl.cdiv(C, tc)
    mask_classes = (C % tc) != 0        # partial last class tile -> tail mask

    kernel = _make_kernel(epsilon, C, tc, num_c, mask_classes)

    if logits_buffers == 2:
        logits_spec = pl.BlockSpec((tb, tc), lambda i, k: (i, k))
    else:
        logits_spec = pl.BlockSpec((tb, tc), lambda i, k: (i, k),
                                   pipeline_mode=pl.Buffered(int(logits_buffers)))

    per_sample = pl.pallas_call(
        kernel,
        out_shape=jax.ShapeDtypeStruct((B, 1), jnp.float32),
        grid_spec=pltpu.PrefetchScalarGridSpec(
            num_scalar_prefetch=0,
            grid=(num_b, num_c),                     # reduction (class) axis last
            in_specs=[
                logits_spec,                                  # streamed logits tile
                pl.BlockSpec((tb, 1), lambda i, k: (i, 0)),   # targets (resident over k)
            ],
            out_specs=pl.BlockSpec((tb, 1), lambda i, k: (i, 0)),
            scratch_shapes=[
                pltpu.VMEM((tb, 1), jnp.float32),   # running max
                pltpu.VMEM((tb, 1), jnp.float32),   # running sum-exp
                pltpu.VMEM((tb, 1), jnp.float32),   # running weighted sum of x
            ],
        ),
        compiler_params=pltpu.CompilerParams(
            dimension_semantics=("parallel", "arbitrary"),
            vmem_limit_bytes=48 * 1024 * 1024,      # safe on v7x's 64 MiB VMEM
        ),
    )(logits, targets_2d)

    per_sample = per_sample.reshape(B)
    if reduction:
        return jnp.mean(per_sample)
    return per_sample


if __name__ == "__main__":
    key = jax.random.PRNGKey(0)
    k1, k2, k3, k4 = jax.random.split(key, 4)

    def ref_loss(logits, targets, eps, num_classes, reduction):
        log_probs = jax.nn.log_softmax(logits.astype(jnp.float32), axis=1)
        onehot = jax.nn.one_hot(targets, num_classes, dtype=jnp.float32)
        smoothed = (1.0 - eps) * onehot + eps / num_classes
        per = jnp.sum(-smoothed * log_probs, axis=1)
        return jnp.mean(per) if reduction else per

    # Case 1: small shapes matching the module forward (single tile, mean).
    B1, C1 = 8, 16
    logits1 = jax.random.normal(k1, (B1, C1), dtype=jnp.float32)
    targets1 = jax.random.randint(k2, (B1,), 0, C1, dtype=jnp.int32)
    loss1 = cross_entropy_label_smooth(logits1, targets1, epsilon=0.1,
                                       reduction=True)
    loss1 = jax.block_until_ready(loss1)
    ref1 = ref_loss(logits1, targets1, 0.1, C1, True)
    assert jnp.allclose(loss1, ref1, atol=1e-5, rtol=1e-5), (loss1, ref1)

    # Case 2: exercises batch tiling (partial last batch tile), streaming class
    # tiles with a masked tail (C % tc != 0, tail-only mask path), and
    # reduction=False.
    B2, C2 = 40, 200
    logits2 = jax.random.normal(k3, (B2, C2), dtype=jnp.float32)
    targets2 = jax.random.randint(k4, (B2,), 0, C2, dtype=jnp.int32)
    loss2 = cross_entropy_label_smooth(logits2, targets2, epsilon=0.1,
                                       reduction=False, tb=16, tc=128)
    loss2 = jax.block_until_ready(loss2)
    ref2 = ref_loss(logits2, targets2, 0.1, C2, False)
    assert jnp.allclose(loss2, ref2, atol=1e-5, rtol=1e-5), (loss2, ref2)

    print("KERNEL_OK")
</pallas_src>

<mosaic_0001>
module attributes {stable_mosaic.version = 11 : i64} {
  func.func @kernel(%arg0: i32, %arg1: i32, %arg2: memref<8x16xf32, #tpu.memory_space<vmem>>, %arg3: memref<8x1xi32, #tpu.memory_space<vmem>>, %arg4: memref<8x1xf32, #tpu.memory_space<vmem>>, %arg5: memref<8x1xf32, #tpu.memory_space<vmem>>, %arg6: memref<8x1xf32, #tpu.memory_space<vmem>>, %arg7: memref<8x1xf32, #tpu.memory_space<vmem>>) attributes {dimension_semantics = [#tpu.dimension_semantics<parallel>, #tpu.dimension_semantics<arbitrary>], iteration_bounds = array<i64: 1, 1>, scalar_prefetch = 0 : i64, scratch_operands = 3 : i64, tpu.core_type = #tpu.core_type<tc>, window_params = [{transform_indices = @transform_0, window_bounds = array<i64: 8, 16>}, {transform_indices = @transform_1, window_bounds = array<i64: 8, 1>}, {transform_indices = @transform_2, window_bounds = array<i64: 8, 1>}]} {
    %c0_i32 = arith.constant 0 : i32
    %0 = arith.cmpi eq, %arg1, %c0_i32 : i32
    %1 = arith.extui %0 : i1 to i32
    %c0_i32_0 = arith.constant 0 : i32
    %2 = arith.cmpi ne, %1, %c0_i32_0 : i32
    scf.if %2 {
      %cst_22 = arith.constant 0xFF800000 : f32
      %40 = vector.broadcast %cst_22 : f32 to vector<8x1xf32>
      %c0_23 = arith.constant 0 : index
      %c0_24 = arith.constant 0 : index
      %41 = vector.load %arg5[%c0_23, %c0_24] : memref<8x1xf32, #tpu.memory_space<vmem>>, vector<8x1xf32>
      tpu.vector_store %arg5[%c0_23, %c0_24], %40 {strides = array<i32>} : memref<8x1xf32, #tpu.memory_space<vmem>>, vector<8x1xf32>,
      %cst_25 = arith.constant 0.000000e+00 : f32
      %42 = vector.broadcast %cst_25 : f32 to vector<8x1xf32>
      %c0_26 = arith.constant 0 : index
      %c0_27 = arith.constant 0 : index
      %43 = vector.load %arg6[%c0_26, %c0_27] : memref<8x1xf32, #tpu.memory_space<vmem>>, vector<8x1xf32>
      tpu.vector_store %arg6[%c0_26, %c0_27], %42 {strides = array<i32>} : memref<8x1xf32, #tpu.memory_space<vmem>>, vector<8x1xf32>,
      %cst_28 = arith.constant 0.000000e+00 : f32
      %44 = vector.broadcast %cst_28 : f32 to vector<8x1xf32>
      %c0_29 = arith.constant 0 : index
      %c0_30 = arith.constant 0 : index
      %45 = vector.load %arg7[%c0_29, %c0_30] : memref<8x1xf32, #tpu.memory_space<vmem>>, vector<8x1xf32>
      tpu.vector_store %arg7[%c0_29, %c0_30], %44 {strides = array<i32>} : memref<8x1xf32, #tpu.memory_space<vmem>>, vector<8x1xf32>,
    } else {
    }
    %c0 = arith.constant 0 : index
    %c0_1 = arith.constant 0 : index
    %3 = vector.load %arg2[%c0, %c0_1] : memref<8x16xf32, #tpu.memory_space<vmem>>, vector<8x16xf32>
    %c0_2 = arith.constant 0 : index
    %c0_3 = arith.constant 0 : index
    %4 = vector.load %arg3[%c0_2, %c0_3] : memref<8x1xi32, #tpu.memory_space<vmem>>, vector<8x1xi32>
    %c16_i32 = arith.constant 16 : i32
    %5 = arith.muli %arg1, %c16_i32 : i32
    %6 = tpu.iota {dimensions = array<i32: 1>} : vector<1x16xi32>
    %7 = vector.broadcast %5 : i32 to vector<1x16xi32>
    %8 = arith.addi %7, %6 : vector<1x16xi32>
    %cst = arith.constant dense<0xFF800000> : vector<8xf32>
    %9 = vector.multi_reduction <maximumf>, %3, %cst [1] : vector<8x16xf32> to vector<8xf32>
    %10 = vector.shape_cast %9 : vector<8xf32> to vector<8x1xf32>
    %c0_4 = arith.constant 0 : index
    %c0_5 = arith.constant 0 : index
    %11 = vector.load %arg5[%c0_4, %c0_5] : memref<8x1xf32, #tpu.memory_space<vmem>>, vector<8x1xf32>
    %12 = arith.maximumf %11, %10 : vector<8x1xf32>
    %13 = arith.subf %11, %12 : vector<8x1xf32>
    %14 = math.exp %13 : vector<8x1xf32>
    %15 = vector.broadcast %12 : vector<8x1xf32> to vector<8x16xf32>
    %16 = arith.subf %3, %15 : vector<8x16xf32>
    %17 = math.exp %16 : vector<8x16xf32>
    %18 = vector.broadcast %8 : vector<1x16xi32> to vector<8x16xi32>
    %19 = vector.broadcast %4 : vector<8x1xi32> to vector<8x16xi32>
    %20 = arith.cmpi eq, %18, %19 : vector<8x16xi32>
    %cst_6 = arith.constant 9.062500e-01 : f32
    %cst_7 = arith.constant 6.250000e-03 : f32
    %21 = vector.broadcast %cst_6 : f32 to vector<8x16xf32>
    %22 = vector.broadcast %cst_7 : f32 to vector<8x16xf32>
    %23 = arith.select %20, %21, %22 : vector<8x16xi1>, vector<8x16xf32>
    %24 = arith.mulf %23, %3 : vector<8x16xf32>
    %c0_8 = arith.constant 0 : index
    %c0_9 = arith.constant 0 : index
    %25 = vector.load %arg6[%c0_8, %c0_9] : memref<8x1xf32, #tpu.memory_space<vmem>>, vector<8x1xf32>
    %26 = arith.mulf %25, %14 : vector<8x1xf32>
    %cst_10 = arith.constant dense<0.000000e+00> : vector<8xf32>
    %27 = vector.multi_reduction <add>, %17, %cst_10 [1] : vector<8x16xf32> to vector<8xf32>
    %28 = vector.shape_cast %27 : vector<8xf32> to vector<8x1xf32>
    %29 = arith.addf %26, %28 : vector<8x1xf32>
    %c0_11 = arith.constant 0 : index
    %c0_12 = arith.constant 0 : index
    %30 = vector.load %arg6[%c0_11, %c0_12] : memref<8x1xf32, #tpu.memory_space<vmem>>, vector<8x1xf32>
    tpu.vector_store %arg6[%c0_11, %c0_12], %29 {strides = array<i32>} : memref<8x1xf32, #tpu.memory_space<vmem>>, vector<8x1xf32>,
    %c0_13 = arith.constant 0 : index
    %c0_14 = arith.constant 0 : index
    %31 = vector.load %arg7[%c0_13, %c0_14] : memref<8x1xf32, #tpu.memory_space<vmem>>, vector<8x1xf32>
    %cst_15 = arith.constant dense<0.000000e+00> : vector<8xf32>
    %32 = vector.multi_reduction <add>, %24, %cst_15 [1] : vector<8x16xf32> to vector<8xf32>
    %33 = vector.shape_cast %32 : vector<8xf32> to vector<8x1xf32>
    %34 = arith.addf %31, %33 : vector<8x1xf32>
    %c0_16 = arith.constant 0 : index
    %c0_17 = arith.constant 0 : index
    %35 = vector.load %arg7[%c0_16, %c0_17] : memref<8x1xf32, #tpu.memory_space<vmem>>, vector<8x1xf32>
    tpu.vector_store %arg7[%c0_16, %c0_17], %34 {strides = array<i32>} : memref<8x1xf32, #tpu.memory_space<vmem>>, vector<8x1xf32>,
    %c0_18 = arith.constant 0 : index
    %c0_19 = arith.constant 0 : index
    %36 = vector.load %arg5[%c0_18, %c0_19] : memref<8x1xf32, #tpu.memory_space<vmem>>, vector<8x1xf32>
    tpu.vector_store %arg5[%c0_18, %c0_19], %12 {strides = array<i32>} : memref<8x1xf32, #tpu.memory_space<vmem>>, vector<8x1xf32>,
    %c0_i32_20 = arith.constant 0 : i32
    %37 = arith.cmpi eq, %arg1, %c0_i32_20 : i32
    %38 = arith.extui %37 : i1 to i32
    %c0_i32_21 = arith.constant 0 : i32
    %39 = arith.cmpi ne, %38, %c0_i32_21 : i32
    scf.if %39 {
      %c0_22 = arith.constant 0 : index
      %c0_23 = arith.constant 0 : index
      %40 = vector.load %arg5[%c0_22, %c0_23] : memref<8x1xf32, #tpu.memory_space<vmem>>, vector<8x1xf32>
      %c0_24 = arith.constant 0 : index
      %c0_25 = arith.constant 0 : index
      %41 = vector.load %arg6[%c0_24, %c0_25] : memref<8x1xf32, #tpu.memory_space<vmem>>, vector<8x1xf32>
      %42 = math.log %41 : vector<8x1xf32>
      %43 = arith.addf %40, %42 : vector<8x1xf32>
      %c0_26 = arith.constant 0 : index
      %c0_27 = arith.constant 0 : index
      %44 = vector.load %arg7[%c0_26, %c0_27] : memref<8x1xf32, #tpu.memory_space<vmem>>, vector<8x1xf32>
      %45 = arith.subf %43, %44 : vector<8x1xf32>
      %c0_28 = arith.constant 0 : index
      %c0_29 = arith.constant 0 : index
      %46 = vector.load %arg4[%c0_28, %c0_29] : memref<8x1xf32, #tpu.memory_space<vmem>>, vector<8x1xf32>
      tpu.vector_store %arg4[%c0_28, %c0_29], %45 {strides = array<i32>} : memref<8x1xf32, #tpu.memory_space<vmem>>, vector<8x1xf32>,
    } else {
    }
    return
  }
  func.func @transform_0(%arg0: i32, %arg1: i32) -> (i32, i32) {
    %c0_i32 = arith.constant 0 : i32
    return %arg0, %arg1 : i32, i32
  }
  func.func @transform_1(%arg0: i32, %arg1: i32) -> (i32, i32) {
    %c0_i32 = arith.constant 0 : i32
    %c0_i32_0 = arith.constant 0 : i32
    return %arg0, %c0_i32 : i32, i32
  }
  func.func @transform_2(%arg0: i32, %arg1: i32) -> (i32, i32) {
    %c0_i32 = arith.constant 0 : i32
    %c0_i32_0 = arith.constant 0 : i32
    return %arg0, %c0_i32 : i32, i32
  }
}

</mosaic_0001>

<llo_original>
// kernel: tpu_custom_call.1
$region0: #{tpu_custom_call.1}
  #allocation0 [shape = 'u32[]', space=smem, size = 0x4, offset = 0x4, fixed_abs, tag = 'smem constant byte address 0x4 - core index']
  #allocation1 [shape = 'u32[144,128]{1,0:T(1,128)}', space=vmem, size = 0x12000, scoped, tag = 'internal scratch']
  #allocation2 [shape = 'f32[8,1]{1,0:T(8,128)}', space=vmem, size = 0x1000, scoped, tag = 'scratch operand']
  #allocation3 [shape = 'f32[8,1]{1,0:T(8,128)}', space=vmem, size = 0x1000, scoped, tag = 'scratch operand']
  #allocation4 [shape = 'f32[8,1]{1,0:T(8,128)}', space=vmem, size = 0x1000, scoped, tag = 'scratch operand']
  %s0 = inlined_call_operand.vmem [shape: f32[8,16], index: 0, kind: input, shape index: {}]
  %s1 = inlined_call_operand.vmem [shape: s32[8,1], index: 1, kind: input, shape index: {}]
  %s2 = inlined_call_operand.vmem [shape: f32[8,1], index: 2, kind: output, shape index: {}]
  %s3 = sld [smem:[#allocation0]]
  $region26: #{tpu_custom_call.1} parent=0
    _
  %s5 = ssub.s32 1, %s3
  %s6 = scalar_select 0, %s5, %s3
  // Predicated region
  $region2: #{tpu_custom_call.1} parent=0 // pred_check
    _
  $region3: #{tpu_custom_call.1} parent=0 // pred_check_branch
    %8 = sbr.rel (0) target = $region5
  $region4: #{tpu_custom_call.1} parent=0 // pred_region
    _
  $region5: #{tpu_custom_call.1} parent=0 // pred_fallthru
    _
  // Predicated region
  $region6: #{tpu_custom_call.1} parent=0 // pred_check
    _
  $region7: #{tpu_custom_call.1} parent=0 // pred_check_branch
    %10 = sbr.rel (0) target = $region9
  $region8: #{tpu_custom_call.1} parent=0 // pred_region
    _
  $region9: #{tpu_custom_call.1} parent=0 // pred_fallthru
    _
  %p11 = scmp.eq.s32.totalorder 0, 0
  // Predicated region
  $region10: #{tpu_custom_call.1} parent=0 // pred_check
    %p12 = pneg %p11
  $region11: #{tpu_custom_call.1} parent=0 // pred_check_branch
    %14 = sbr.rel (%p12) target = $region13
  $region12: #{tpu_custom_call.1} parent=0 // pred_region
    %vm15 = vcmask 7168
    %16 = vst.msk [vmem:[#allocation2] sm:$0xff] %vm15, -inf
    %17 = vst.msk [vmem:[#allocation3] sm:$0xff] %vm15, 0.0
    %18 = vst.msk [vmem:[#allocation4] sm:$0xff] %vm15, 0.0
  $region13: #{tpu_custom_call.1} parent=0 // pred_fallthru
    _
  %v19 = vld [vmem:[%s0] sm:$0xff]
  %v20 = vld [vmem:[%s1] sm:$0xff]
  %s21 = smul.u32 0, 16
  %v22 = vlaneseq
  %v23 = vand.u32 %v22, 127
  %v24 = vstv %s21
  %v25 = vadd.s32 %v24, %v23
  %vm26 = vcmask 130048
  %v27 = vsel %vm26, %v19, -inf
  %28 = vmax.xlane.f32.xlu0 %v27
  %v29 = vpop.xlane.xlu0 %28
  %v30 = vld [vmem:[#allocation2] sm:$0xff]
  %v31 = vmax.f32 %v30, %v29
  %v32 = vsub.f32 %v30, %v31
  %v33 = vmul.f32 %v32, 1.442695
  %v34 = vpow.pop %v33
  %36 = vset.pattern.permute.xlu0 0
  %37 = vperm.xlu0 %36, %v31
  %v38 = vpop.permute.xlu0 %37
  %v40 = vsub.f32 %v19, %v38
  %v41 = vmul.f32 %v40, 1.442695
  %v42 = vpow.pop %v41
  %43 = vset.pattern.permute.xlu0 0
  %44 = vperm.xlu0 %43, %v20
  %v45 = vpop.permute.xlu0 %44
  %vm46 = vcmp.eq.s32.totalorder %v25, %v45
  %v47 = vsel %vm46, 0.90625, 0.00625
  %v48 = vmul.f32 %v47, %v19
  %v49 = vld [vmem:[#allocation3] sm:$0xff]
  %v50 = vmul.f32 %v49, %v34
  %v51 = vsel %vm26, %v42, 0.0
  %52 = vadd.xlane.f32.xlu0 %v51
  %v53 = vpop.xlane.xlu0 %52
  %v54 = vadd.f32 %v50, %v53
  %vm55 = vcmask 7168
  %56 = vst.msk [vmem:[#allocation3] sm:$0xff] %vm55, %v54
  %v57 = vld [vmem:[#allocation4] sm:$0xff]
  %v58 = vsel %vm26, %v48, 0.0
  %59 = vadd.xlane.f32.xlu0 %v58
  %v60 = vpop.xlane.xlu0 %59
  %v61 = vadd.f32 %v57, %v60
  %62 = vst.msk [vmem:[#allocation4] sm:$0xff] %vm55, %v61
  %63 = vst.msk [vmem:[#allocation2] sm:$0xff] %vm55, %v31
  // Predicated region
  $region14: #{tpu_custom_call.1} parent=0 // pred_check
    %p64 = pneg %p11
  $region15: #{tpu_custom_call.1} parent=0 // pred_check_branch
    %66 = sbr.rel (%p64) target = $region17
  $region16: #{tpu_custom_call.1} parent=0 // pred_region
    %v67 = vld [vmem:[#allocation2] sm:$0xff]
    %v68 = vld [vmem:[#allocation3] sm:$0xff]
    %v69 = vlog2.pop %v68
    %v70 = vmul.f32 %v69, 0.6931472
    %v71 = vadd.f32 %v67, %v70
    %v72 = vld [vmem:[#allocation4] sm:$0xff]
    %v73 = vsub.f32 %v71, %v72
    %74 = vst.msk [vmem:[%s2] sm:$0xff] %vm55, %v73
  $region17: #{tpu_custom_call.1} parent=0 // pred_fallthru
    _
  // Predicated region
  $region18: #{tpu_custom_call.1} parent=0 // pred_check
    _
  $region19: #{tpu_custom_call.1} parent=0 // pred_check_branch
    %76 = sbr.rel (0) target = $region21
  $region20: #{tpu_custom_call.1} parent=0 // pred_region
    _
  $region21: #{tpu_custom_call.1} parent=0 // pred_fallthru
    _
  // Predicated region
  $region22: #{tpu_custom_call.1} parent=0 // pred_check
    _
  $region23: #{tpu_custom_call.1} parent=0 // pred_check_branch
    %78 = sbr.rel (0) target = $region25
  $region24: #{tpu_custom_call.1} parent=0 // pred_region
    _
  $region25: #{tpu_custom_call.1} parent=0 // pred_fallthru
    _

</llo_original>
